<compile_context>
chip_gen: v5e
topology: v5e:2x2
jax: 0.10.0
libtpu: 0.0.40
codegen_flags: <defaults>
</compile_context>

<pallas_src>
import functools
import math

import jax
import jax.numpy as jnp
import numpy as np
from jax.experimental import pallas as pl
from jax.experimental.pallas import tpu as pltpu


# ----------------------------- Pallas kernel ------------------------------ #

def _generator_kernel(h_ref, *refs, n_layers):
    """Fused generator forward.

    h_ref:    (N, Cin0)        f32   latent+embedding (NCHW-flat, spatial = 1x1)
    refs[:L]              B_l  bf16  (K_l, M_l) dense conv-transpose operators
    refs[L:2L]        shift_l  f32   (1, M_l)   folded conv-bias + BN shift
    refs[2L]          out_ref  f32   (N, C*H*W) NCHW-flat image, lane-dense
    """
    b_refs = refs[:n_layers]
    s_refs = refs[n_layers:2 * n_layers]
    o_ref = refs[2 * n_layers]

    h = h_ref[...]
    for layer in range(n_layers):
        # MXU matmul: bf16 inputs (v6e/v7x native), f32 accumulation.
        y = jnp.dot(h.astype(jnp.bfloat16), b_refs[layer][...],
                    preferred_element_type=jnp.float32)
        y = y + s_refs[layer][...]                     # f32 epilogue (v5e-safe)
        if layer < n_layers - 1:
            h = jnp.maximum(y, 0.2 * y)                # LeakyReLU(0.2): one VPU max
        else:
            h = jnp.tanh(y)                            # EUP transcendental
    o_ref[...] = h.astype(o_ref.dtype)


def generator_pallas(h0, b_mats, shifts, out_dim):
    n = h0.shape[0]
    n_layers = len(b_mats)
    return pl.pallas_call(
        functools.partial(_generator_kernel, n_layers=n_layers),
        out_shape=jax.ShapeDtypeStruct((n, out_dim), jnp.float32),
        in_specs=[pl.BlockSpec(memory_space=pltpu.MemorySpace.VMEM)]
                 * (1 + 2 * n_layers),
        out_specs=pl.BlockSpec(memory_space=pltpu.MemorySpace.VMEM),
    )(h0, *b_mats, *shifts)


# --------------- host-side (init-time) operator construction --------------- #

def _convtranspose421_operator(w, scale, h_in, w_in):
    """Dense NCHW-flat operator for ConvTranspose2d(kernel=4, stride=2, pad=1).

    flat_out = flat_in @ B  computes the transposed convolution with the
    per-output-channel `scale` (eval-mode BatchNorm) folded into the weights.
    w: (Cin, Cout, 4, 4) in PyTorch ConvTranspose2d layout.
    Output mapping: oy = 2*iy - 1 + ky, ox = 2*ix - 1 + kx.
    """
    w = np.asarray(w, np.float32) * np.asarray(scale, np.float32)[None, :, None, None]
    cin, cout = w.shape[0], w.shape[1]
    h_out, w_out = 2 * h_in, 2 * w_in
    op = np.zeros((cin * h_in * w_in, cout * h_out * w_out), np.float32)
    for ky in range(4):
        for kx in range(4):
            # 0/1 spatial scatter map of this kernel tap.
            sel = np.zeros((h_in * w_in, h_out * w_out), np.float32)
            for iy in range(h_in):
                oy = 2 * iy - 1 + ky
                if not 0 <= oy < h_out:
                    continue
                for ix in range(w_in):
                    ox = 2 * ix - 1 + kx
                    if not 0 <= ox < w_out:
                        continue
                    sel[iy * w_in + ix, oy * w_out + ox] = 1.0
            # kron gives index [(ci*HW + s_in), (co*HoWo + s_out)] = w*sel  (NCHW-flat).
            op += np.kron(w[:, :, ky, kx], sel)
    return op


def init_generator_params(key, num_classes, embed_size, z_dim, im_shape,
                          inner_feature):
    im_channel, im_size = im_shape[0], im_shape[-1]
    if im_shape[-1] != im_shape[-2]:
        raise ValueError("The image's width must equal its height.")
    n_inner = int(math.log2(im_size)) - 2
    if 2 ** (n_inner + 2) != im_size:
        raise ValueError("The image's size must be a power of two.")

    chans = ([z_dim + embed_size]
             + [inner_feature * 2 ** (n_inner - i) for i in range(n_inner + 1)]
             + [im_channel])
    n_layers = len(chans) - 1
    eps = 1e-5

    keys = iter(jax.random.split(key, 8 * n_layers + 2))
    embed = jax.random.normal(next(keys), (num_classes, embed_size), jnp.float32)

    b_mats, shifts = [], []
    h = w = 1                                    # spatial size entering each layer
    for layer in range(n_layers):
        cin, cout = chans[layer], chans[layer + 1]
        wgt = jax.random.normal(next(keys), (cin, cout, 4, 4),
                                jnp.float32) / math.sqrt(cin * 16)
        bias = 0.05 * jax.random.normal(next(keys), (cout,), jnp.float32)
        if layer < n_layers - 1:
            # TODO(synk): BatchNorm2d is implemented in eval mode (running
            # statistics folded into scale/shift); training-mode batch stats
            # are not computed.
            gamma = 1.0 + 0.1 * jax.random.normal(next(keys), (cout,), jnp.float32)
            beta = 0.1 * jax.random.normal(next(keys), (cout,), jnp.float32)
            r_mean = 0.05 * jax.random.normal(next(keys), (cout,), jnp.float32)
            r_var = 1.0 + 0.1 * jax.nn.softplus(
                jax.random.normal(next(keys), (cout,), jnp.float32))
            scale = gamma / jnp.sqrt(r_var + eps)
            shift = (bias - r_mean) * scale + beta
        else:
            scale = jnp.ones((cout,), jnp.float32)
            shift = bias

        op = _convtranspose421_operator(np.asarray(wgt), np.asarray(scale), h, w)
        shift_flat = np.repeat(np.asarray(shift, np.float32), 4 * h * w)
        b_mats.append(jnp.asarray(op, jnp.bfloat16))          # bf16 MXU inputs
        shifts.append(jnp.asarray(shift_flat, jnp.float32).reshape(1, -1))
        h, w = 2 * h, 2 * w

    return {"embed": embed, "B": b_mats, "shift": shifts}


# ----------------------------- Generator ---------------------------------- #

def generator_forward(params, x, label, *, im_shape):
    """x: (N, z_dim) f32, label: (N,) int32 -> (N, C, H, W) in [-1, 1]."""
    emb = params["embed"][label]                          # (N, embed_size)
    h0 = jnp.concatenate([x, emb], axis=1)                # NCHW-flat (spatial 1x1)
    c, hh, ww = im_shape
    out = generator_pallas(h0, params["B"], params["shift"], c * hh * ww)
    return out.reshape(x.shape[0], c, hh, ww)             # metadata-only reshape


# --------------------------------- main ------------------------------------ #

if __name__ == "__main__":
    num_classes = 10
    embed_size = 8
    z_dim = 16
    im_shape = (1, 16, 16)     # small image: 1 -> 2 -> 4 -> 8 -> 16
    inner_feature = 8
    N = 2

    key = jax.random.PRNGKey(0)
    k_params, k_x, k_lbl = jax.random.split(key, 3)

    params = init_generator_params(k_params, num_classes, embed_size, z_dim,
                                   im_shape, inner_feature)
    x = jax.random.normal(k_x, (N, z_dim), jnp.float32)
    label = jax.random.randint(k_lbl, (N,), 0, num_classes, jnp.int32)

    fwd = jax.jit(functools.partial(generator_forward, im_shape=im_shape))
    out = jax.block_until_ready(fwd(params, x, label))

    assert out.shape == (N,) + tuple(im_shape), out.shape
    assert bool(jnp.all(jnp.isfinite(out)))
    assert bool(jnp.all(jnp.abs(out) <= 1.0 + 1e-6))   # tanh output range
    print("KERNEL_OK")
</pallas_src>

<mosaic_0001>
module attributes {stable_mosaic.version = 11 : i64} {
  func.func @_generator_kernel(%arg0: memref<2x24xf32, #tpu.memory_space<vmem>>, %arg1: memref<24x128xbf16, #tpu.memory_space<vmem>>, %arg2: memref<128x256xbf16, #tpu.memory_space<vmem>>, %arg3: memref<256x512xbf16, #tpu.memory_space<vmem>>, %arg4: memref<512x256xbf16, #tpu.memory_space<vmem>>, %arg5: memref<1x128xf32, #tpu.memory_space<vmem>>, %arg6: memref<1x256xf32, #tpu.memory_space<vmem>>, %arg7: memref<1x512xf32, #tpu.memory_space<vmem>>, %arg8: memref<1x256xf32, #tpu.memory_space<vmem>>, %arg9: memref<2x256xf32, #tpu.memory_space<vmem>>) attributes {dimension_semantics = [], scalar_prefetch = 0 : i64, scratch_operands = 0 : i64, tpu.core_type = #tpu.core_type<tc>} {
    %c0 = arith.constant 0 : index
    %c0_0 = arith.constant 0 : index
    %0 = vector.load %arg0[%c0, %c0_0] : memref<2x24xf32, #tpu.memory_space<vmem>>, vector<2x24xf32>
    %1 = arith.truncf %0 : vector<2x24xf32> to vector<2x24xbf16>
    %c0_1 = arith.constant 0 : index
    %c0_2 = arith.constant 0 : index
    %2 = vector.load %arg1[%c0_1, %c0_2] : memref<24x128xbf16, #tpu.memory_space<vmem>>, vector<24x128xbf16>
    %cst = arith.constant dense<0.000000e+00> : vector<2x128xf32>
    %3 = tpu.matmul %1, %2, %cst {dimension_numbers = #tpu.dot_dimension_numbers<[1], [0], [0], [1], [0, 0, 1, 1], [], []>} : vector<2x24xbf16>, vector<24x128xbf16>, vector<2x128xf32> -> vector<2x128xf32>
    %c0_3 = arith.constant 0 : index
    %c0_4 = arith.constant 0 : index
    %4 = vector.load %arg5[%c0_3, %c0_4] : memref<1x128xf32, #tpu.memory_space<vmem>>, vector<1x128xf32>
    %5 = vector.broadcast %4 : vector<1x128xf32> to vector<2x128xf32>
    %6 = arith.addf %3, %5 : vector<2x128xf32>
    %cst_5 = arith.constant 2.000000e-01 : f32
    %7 = vector.broadcast %cst_5 : f32 to vector<2x128xf32>
    %8 = arith.mulf %7, %6 : vector<2x128xf32>
    %9 = arith.maximumf %6, %8 : vector<2x128xf32>
    %10 = arith.truncf %9 : vector<2x128xf32> to vector<2x128xbf16>
    %c0_6 = arith.constant 0 : index
    %c0_7 = arith.constant 0 : index
    %11 = vector.load %arg2[%c0_6, %c0_7] : memref<128x256xbf16, #tpu.memory_space<vmem>>, vector<128x256xbf16>
    %cst_8 = arith.constant dense<0.000000e+00> : vector<2x256xf32>
    %12 = tpu.matmul %10, %11, %cst_8 {dimension_numbers = #tpu.dot_dimension_numbers<[1], [0], [0], [1], [0, 0, 1, 1], [], []>} : vector<2x128xbf16>, vector<128x256xbf16>, vector<2x256xf32> -> vector<2x256xf32>
    %c0_9 = arith.constant 0 : index
    %c0_10 = arith.constant 0 : index
    %13 = vector.load %arg6[%c0_9, %c0_10] : memref<1x256xf32, #tpu.memory_space<vmem>>, vector<1x256xf32>
    %14 = vector.broadcast %13 : vector<1x256xf32> to vector<2x256xf32>
    %15 = arith.addf %12, %14 : vector<2x256xf32>
    %cst_11 = arith.constant 2.000000e-01 : f32
    %16 = vector.broadcast %cst_11 : f32 to vector<2x256xf32>
    %17 = arith.mulf %16, %15 : vector<2x256xf32>
    %18 = arith.maximumf %15, %17 : vector<2x256xf32>
    %19 = arith.truncf %18 : vector<2x256xf32> to vector<2x256xbf16>
    %c0_12 = arith.constant 0 : index
    %c0_13 = arith.constant 0 : index
    %20 = vector.load %arg3[%c0_12, %c0_13] : memref<256x512xbf16, #tpu.memory_space<vmem>>, vector<256x512xbf16>
    %cst_14 = arith.constant dense<0.000000e+00> : vector<2x512xf32>
    %21 = tpu.matmul %19, %20, %cst_14 {dimension_numbers = #tpu.dot_dimension_numbers<[1], [0], [0], [1], [0, 0, 1, 1], [], []>} : vector<2x256xbf16>, vector<256x512xbf16>, vector<2x512xf32> -> vector<2x512xf32>
    %c0_15 = arith.constant 0 : index
    %c0_16 = arith.constant 0 : index
    %22 = vector.load %arg7[%c0_15, %c0_16] : memref<1x512xf32, #tpu.memory_space<vmem>>, vector<1x512xf32>
    %23 = vector.broadcast %22 : vector<1x512xf32> to vector<2x512xf32>
    %24 = arith.addf %21, %23 : vector<2x512xf32>
    %cst_17 = arith.constant 2.000000e-01 : f32
    %25 = vector.broadcast %cst_17 : f32 to vector<2x512xf32>
    %26 = arith.mulf %25, %24 : vector<2x512xf32>
    %27 = arith.maximumf %24, %26 : vector<2x512xf32>
    %28 = arith.truncf %27 : vector<2x512xf32> to vector<2x512xbf16>
    %c0_18 = arith.constant 0 : index
    %c0_19 = arith.constant 0 : index
    %29 = vector.load %arg4[%c0_18, %c0_19] : memref<512x256xbf16, #tpu.memory_space<vmem>>, vector<512x256xbf16>
    %cst_20 = arith.constant dense<0.000000e+00> : vector<2x256xf32>
    %30 = tpu.matmul %28, %29, %cst_20 {dimension_numbers = #tpu.dot_dimension_numbers<[1], [0], [0], [1], [0, 0, 1, 1], [], []>} : vector<2x512xbf16>, vector<512x256xbf16>, vector<2x256xf32> -> vector<2x256xf32>
    %c0_21 = arith.constant 0 : index
    %c0_22 = arith.constant 0 : index
    %31 = vector.load %arg8[%c0_21, %c0_22] : memref<1x256xf32, #tpu.memory_space<vmem>>, vector<1x256xf32>
    %32 = vector.broadcast %31 : vector<1x256xf32> to vector<2x256xf32>
    %33 = arith.addf %30, %32 : vector<2x256xf32>
    %34 = math.tanh %33 : vector<2x256xf32>
    %c0_23 = arith.constant 0 : index
    %c0_24 = arith.constant 0 : index
    %35 = vector.load %arg9[%c0_23, %c0_24] : memref<2x256xf32, #tpu.memory_space<vmem>>, vector<2x256xf32>
    tpu.vector_store %arg9[%c0_23, %c0_24], %34 {strides = array<i32>} : memref<2x256xf32, #tpu.memory_space<vmem>>, vector<2x256xf32>,
    return
  }
}

</mosaic_0001>

<llo_original>
// kernel: generator_forward.1
$region0: #{generator_forward.1}
  #allocation0 [shape = 'u32[]', space=smem, size = 0x4, offset = 0x4, fixed_abs, tag = 'smem constant byte address 0x4 - core index']
  #allocation1 [shape = 'u32[72,128]{1,0:T(1,128)}', space=vmem, size = 0x9000, scoped, tag = 'internal scratch']
  %s0 = inlined_call_operand.vmem [shape: f32[2,24], index: 0, kind: input, shape index: {}]
  %s1 = inlined_call_operand.vmem [shape: bf16[24,128], index: 1, kind: input, shape index: {}]
  %s2 = inlined_call_operand.hbm [shape: bf16[128,256], index: 2, kind: input, shape index: {}]
  %s3 = inlined_call_operand.hbm [shape: bf16[256,512], index: 3, kind: input, shape index: {}]
  %s4 = inlined_call_operand.hbm [shape: bf16[512,256], index: 4, kind: input, shape index: {}]
  %s5 = inlined_call_operand.vmem [shape: f32[1,128], index: 5, kind: input, shape index: {}]
  %s6 = inlined_call_operand.vmem [shape: f32[1,256], index: 6, kind: input, shape index: {}]
  %s7 = inlined_call_operand.vmem [shape: f32[1,512], index: 7, kind: input, shape index: {}]
  %s8 = inlined_call_operand.vmem [shape: f32[1,256], index: 8, kind: input, shape index: {}]
  %s9 = inlined_call_operand.vmem [shape: f32[2,256], index: 9, kind: output, shape index: {}]
  %s10 = sld [smem:[#allocation0]]
  $region58: #{generator_forward.1} parent=0
    _
  %s12 = ssub.s32 1, %s10
  %s13 = scalar_select 0, %s12, %s10
  $region1: #{generator_forward.1} parent=0
    #allocation2 [shape = 'u8[65536]{0}', space=vmem, size = 0x10000, scoped, tag = 'input window, operand 2, single buffered']
    #allocation3 [shape = 's32[1]{0}', space=sflag, size = 0x4, scoped, tag = 'scoped memory for generator_forward.1']
    #allocation4 [shape = 'u8[262144]{0}', space=vmem, size = 0x40000, scoped, tag = 'input window, operand 3, single buffered']
    #allocation5 [shape = 's32[1]{0}', space=sflag, size = 0x4, scoped, tag = 'scoped memory for generator_forward.1']
    #allocation6 [shape = 'u8[262144]{0}', space=vmem, size = 0x40000, scoped, tag = 'input window, operand 4, single buffered']
    %14 = vsyncpa [#allocation3], 0
    %15 = vsyncpa [#allocation5], 0
    // Predicated region
    $region2: #{generator_forward.1} parent=1 // pred_check
      _
    $region3: #{generator_forward.1} parent=1 // pred_check_branch
      %17 = sbr.rel (0) target = $region5
    $region4: #{generator_forward.1} parent=1 // pred_region
      _
    $region5: #{generator_forward.1} parent=1 // pred_fallthru
      _
    // Predicated region
    $region6: #{generator_forward.1} parent=1 // pred_check
      _
    $region7: #{generator_forward.1} parent=1 // pred_check_branch
      %19 = sbr.rel (0) target = $region9
    $region8: #{generator_forward.1} parent=1 // pred_region
      _
    $region9: #{generator_forward.1} parent=1 // pred_fallthru
      _
    // Predicated region
    $region10: #{generator_forward.1} parent=1 // pred_check
      _
    $region11: #{generator_forward.1} parent=1 // pred_check_branch
      %21 = sbr.rel (0) target = $region13
    $region12: #{generator_forward.1} parent=1 // pred_region
      %23 = vsyncadd [#allocation3], 0
      %s24 = sshll.u32 %s2, 4
      %s25 = int_to_ptr.hbm [resolvable:$true] %s24
      %s26 = sshll.u32 [#allocation2], 4
      %s27 = int_to_ptr.vmem [resolvable:$true] %s26
      %32 = dma.hbm_to_vmem [thread:$0]  %s25, 2048, %s27, [#allocation3], 128, 128, 8
    $region13: #{generator_forward.1} parent=1 // pred_fallthru
      _
    // Predicated region
    $region14: #{generator_forward.1} parent=1 // pred_check
      _
    $region15: #{generator_forward.1} parent=1 // pred_check_branch
      %34 = sbr.rel (0) target = $region17
    $region16: #{generator_forward.1} parent=1 // pred_region
      %36 = vsyncadd [#allocation5], 0
      %s37 = sshll.u32 %s3, 4
      %s38 = int_to_ptr.hbm [resolvable:$true] %s37
      %s39 = sshll.u32 [#allocation4], 4
      %s40 = int_to_ptr.vmem [resolvable:$true] %s39
      %45 = dma.hbm_to_vmem [thread:$0]  %s38, 8192, %s40, [#allocation5], 256, 256, 16
    $region17: #{generator_forward.1} parent=1 // pred_fallthru
      _
    // Predicated region
    $region18: #{generator_forward.1} parent=1 // pred_check
      _
    $region19: #{generator_forward.1} parent=1 // pred_check_branch
      %47 = sbr.rel (0) target = $region21
    $region20: #{generator_forward.1} parent=1 // pred_region
      %49 = vsyncadd [#allocation5], 0
      %s50 = sshll.u32 %s4, 4
      %s51 = int_to_ptr.hbm [resolvable:$true] %s50
      %s52 = sshll.u32 [#allocation6], 4
      %s53 = int_to_ptr.vmem [resolvable:$true] %s52
      %58 = dma.hbm_to_vmem [thread:$0]  %s51, 8192, %s53, [#allocation5], 128, 128, 8
    $region21: #{generator_forward.1} parent=1 // pred_fallthru
      _
    // Predicated region
    $region22: #{generator_forward.1} parent=1 // pred_check
      _
    $region23: #{generator_forward.1} parent=1 // pred_check_branch
      %60 = sbr.rel (0) target = $region25
    $region24: #{generator_forward.1} parent=1 // pred_region
      _
    $region25: #{generator_forward.1} parent=1 // pred_fallthru
      _
    // Predicated region
    $region26: #{generator_forward.1} parent=1 // pred_check
      _
    $region27: #{generator_forward.1} parent=1 // pred_check_branch
      %62 = sbr.rel (0) target = $region29
    $region28: #{generator_forward.1} parent=1 // pred_region
      _
    $region29: #{generator_forward.1} parent=1 // pred_fallthru
      _
    // Predicated region
    $region30: #{generator_forward.1} parent=1 // pred_check
      _
    $region31: #{generator_forward.1} parent=1 // pred_check_branch
      %64 = sbr.rel (0) target = $region33
    $region32: #{generator_forward.1} parent=1 // pred_region
      _
    $region33: #{generator_forward.1} parent=1 // pred_fallthru
      _
    // Predicated region
    $region34: #{generator_forward.1} parent=1 // pred_check
      _
    $region35: #{generator_forward.1} parent=1 // pred_check_branch
      %66 = sbr.rel (0) target = $region37
    $region36: #{generator_forward.1} parent=1 // pred_region
      _
    $region37: #{generator_forward.1} parent=1 // pred_fallthru
      _
    // Predicated region
    $region38: #{generator_forward.1} parent=1 // pred_check
      _
    $region39: #{generator_forward.1} parent=1 // pred_check_branch
      %68 = sbr.rel (0) target = $region41
    $region40: #{generator_forward.1} parent=1 // pred_region
      %70 = dma.done [#allocation3], 2048
    $region41: #{generator_forward.1} parent=1 // pred_fallthru
      _
    // Predicated region
    $region42: #{generator_forward.1} parent=1 // pred_check
      _
    $region43: #{generator_forward.1} parent=1 // pred_check_branch
      %72 = sbr.rel (0) target = $region45
    $region44: #{generator_forward.1} parent=1 // pred_region
      %74 = dma.done [#allocation5], 8192
    $region45: #{generator_forward.1} parent=1 // pred_fallthru
      _
    // Predicated region
    $region46: #{generator_forward.1} parent=1 // pred_check
      _
    $region47: #{generator_forward.1} parent=1 // pred_check_branch
      %76 = sbr.rel (0) target = $region49
    $region48: #{generator_forward.1} parent=1 // pred_region
      %78 = dma.done [#allocation5], 8192
    $region49: #{generator_forward.1} parent=1 // pred_fallthru
      _
    %v80 = vld [vmem:[%s0] sm:$0x3]
    %v81 = vpack.c.bf16 %v80, %v80
    %v82 = vld [vmem:[%s1] sm:$0xf]
    %v83 = vld [vmem:[%s1 + $0x4] sm:$0xf]
    %v84 = vld [vmem:[%s1 + $0x8] sm:$0xf]
    %v85 = vld [vmem:[%s5] sm:$0x1]
    %v87 = vperm.slane %v85, 0
    %v92 = vunpack.c.l.b16 %v82
    %v93 = vunpack.c.l.b16 %v83
    %v94 = vunpack.c.l.b16 %v84
    %v95 = vpack.c.b16 %v93, %v92
    %v96 = vpack.c.b16 %v94, %v94
    %vm98 = vcmask 195584
    %v100 = vsel %vm98, %v81, 0
    %vm102 = vcmask 1043456
    %v104 = vsel %vm102, %v96, 0
    %106 = vmatpush.bf16.msra.mxu0 0
    %107 = vmatpush.bf16.msra.mxu0 0
    %108 = vmatpush.bf16.msra.mxu0 0
    %109 = vmatpush.bf16.msra.mxu0 0
    %110 = vmatpush.bf16.msra.mxu0 0
    %111 = vmatpush.bf16.msra.mxu0 0
    %112 = vmatpush.bf16.msra.mxu0 %v104
    %113 = vmatpush.bf16.msra.mxu0 %v95
    %114 = vmatmul.bf16.gmra.mxu0 %v100
    %v115 = vpop.f32.mrf.mxu0
    %v116 = vadd.f32 %v87, %v115
    %v117 = vpop.f32.mrf.mxu0
    %118 = vdwg.mxu0
    %v119 = vmul.f32 %v116, 0.2
    %v120 = vmax.f32 %v116, %v119
    %v121 = vpack.c.bf16 %v120, %v120
    %v122 = vld [vmem:[#allocation2] sm:$0xff]
    %v123 = vld [vmem:[#allocation2 + $0x8] sm:$0xff]
    %v124 = vld [vmem:[#allocation2 + $0x10] sm:$0xff]
    %v125 = vld [vmem:[#allocation2 + $0x18] sm:$0xff]
    %v126 = vld [vmem:[#allocation2 + $0x20] sm:$0xff]
    %v127 = vld [vmem:[#allocation2 + $0x28] sm:$0xff]
    %v128 = vld [vmem:[#allocation2 + $0x30] sm:$0xff]
    %v129 = vld [vmem:[#allocation2 + $0x38] sm:$0xff]
    %v130 = vld [vmem:[#allocation2 + $0x40] sm:$0xff]
    %v131 = vld [vmem:[#allocation2 + $0x48] sm:$0xff]
    %v132 = vld [vmem:[#allocation2 + $0x50] sm:$0xff]
    %v133 = vld [vmem:[#allocation2 + $0x58] sm:$0xff]
    %v134 = vld [vmem:[#allocation2 + $0x60] sm:$0xff]
    %v135 = vld [vmem:[#allocation2 + $0x68] sm:$0xff]
    %v136 = vld [vmem:[#allocation2 + $0x70] sm:$0xff]
    %v137 = vld [vmem:[#allocation2 + $0x78] sm:$0xff]
    %v138 = vld [vmem:[%s6] sm:$0x3]
    %v140 = vperm.slane %v138, 0
    %v141 = vperm.slane %v138, 1
    %v160 = vunpack.c.l.b16 %v122
    %v161 = vunpack.c.h.b16 %v122
    %v162 = vunpack.c.l.b16 %v123
    %v163 = vunpack.c.h.b16 %v123
    %v164 = vunpack.c.l.b16 %v124
    %v165 = vunpack.c.h.b16 %v124
    %v166 = vunpack.c.l.b16 %v125
    %v167 = vunpack.c.h.b16 %v125
    %v168 = vunpack.c.l.b16 %v126
    %v169 = vunpack.c.h.b16 %v126
    %v170 = vunpack.c.l.b16 %v127
    %v171 = vunpack.c.h.b16 %v127
    %v172 = vunpack.c.l.b16 %v128
    %v173 = vunpack.c.h.b16 %v128
    %v174 = vunpack.c.l.b16 %v129
    %v175 = vunpack.c.h.b16 %v129
    %v176 = vunpack.c.l.b16 %v130
    %v177 = vunpack.c.h.b16 %v130
    %v178 = vunpack.c.l.b16 %v131
    %v179 = vunpack.c.h.b16 %v131
    %v180 = vunpack.c.l.b16 %v132
    %v181 = vunpack.c.h.b16 %v132
    %v182 = vunpack.c.l.b16 %v133
    %v183 = vunpack.c.h.b16 %v133
    %v184 = vunpack.c.l.b16 %v134
    %v185 = vunpack.c.h.b16 %v134
    %v186 = vunpack.c.l.b16 %v135
    %v187 = vunpack.c.h.b16 %v135
    %v188 = vunpack.c.l.b16 %v136
    %v189 = vunpack.c.h.b16 %v136
    %v190 = vunpack.c.l.b16 %v137
    %v191 = vunpack.c.h.b16 %v137
    %v192 = vpack.c.b16 %v162, %v160
    %v193 = vpack.c.b16 %v163, %v161
    %v194 = vpack.c.b16 %v166, %v164
    %v195 = vpack.c.b16 %v167, %v165
    %v196 = vpack.c.b16 %v170, %v168
    %v197 = vpack.c.b16 %v171, %v169
    %v198 = vpack.c.b16 %v174, %v172
    %v199 = vpack.c.b16 %v175, %v173
    %v200 = vpack.c.b16 %v178, %v176
    %v201 = vpack.c.b16 %v179, %v177
    %v202 = vpack.c.b16 %v182, %v180
    %v203 = vpack.c.b16 %v183, %v181
    %v204 = vpack.c.b16 %v186, %v184
    %v205 = vpack.c.b16 %v187, %v185
    %v206 = vpack.c.b16 %v190, %v188
    %v207 = vpack.c.b16 %v191, %v189
    %224 = vmatpush.bf16.msra.mxu0 %v206
    %225 = vmatpush.bf16.msra.mxu0 %v204
    %226 = vmatpush.bf16.msra.mxu0 %v202
    %227 = vmatpush.bf16.msra.mxu0 %v200
    %228 = vmatpush.bf16.msra.mxu0 %v198
    %229 = vmatpush.bf16.msra.mxu0 %v196
    %230 = vmatpush.bf16.msra.mxu0 %v194
    %231 = vmatpush.bf16.msra.mxu0 %v192
    %232 = vmatmul.bf16.gmra.mxu0 %v121
    %v233 = vpop.f32.mrf.mxu0
    %v234 = vadd.f32 %v140, %v233
    %v235 = vpop.f32.mrf.mxu0
    %236 = vdwg.mxu0
    %237 = vmatpush.bf16.msra.mxu0 %v207
    %238 = vmatpush.bf16.msra.mxu0 %v205
    %239 = vmatpush.bf16.msra.mxu0 %v203
    %240 = vmatpush.bf16.msra.mxu0 %v201
    %241 = vmatpush.bf16.msra.mxu0 %v199
    %242 = vmatpush.bf16.msra.mxu0 %v197
    %243 = vmatpush.bf16.msra.mxu0 %v195
    %244 = vmatpush.bf16.msra.mxu0 %v193
    %245 = vmatmul.bf16.gmra.mxu0 %v121
    %v246 = vpop.f32.mrf.mxu0
    %v247 = vadd.f32 %v141, %v246
    %v248 = vpop.f32.mrf.mxu0
    %249 = vdwg.mxu0
    %v250 = vmul.f32 %v234, 0.2
    %v251 = vmul.f32 %v247, 0.2
    %v252 = vmax.f32 %v234, %v250
    %v253 = vmax.f32 %v247, %v251
    %v254 = vpack.c.bf16 %v252, %v252
    %v255 = vpack.c.bf16 %v253, %v253
    %v256 = vld [vmem:[#allocation4] sm:$0xff]
    %v257 = vld [vmem:[#allocation4 + $0x8] sm:$0xff]
    %v258 = vld [vmem:[#allocation4 + $0x10] sm:$0xff]
    %v259 = vld [vmem:[#allocation4 + $0x18] sm:$0xff]
    %v260 = vld [vmem:[#allocation4 + $0x20] sm:$0xff]
    %v261 = vld [vmem:[#allocation4 + $0x28] sm:$0xff]
    %v262 = vld [vmem:[#allocation4 + $0x30] sm:$0xff]
    %v263 = vld [vmem:[#allocation4 + $0x38] sm:$0xff]
    %v264 = vld [vmem:[#allocation4 + $0x40] sm:$0xff]
    %v265 = vld [vmem:[#allocation4 + $0x48] sm:$0xff]
    %v266 = vld [vmem:[#allocation4 + $0x50] sm:$0xff]
    %v267 = vld [vmem:[#allocation4 + $0x58] sm:$0xff]
    %v268 = vld [vmem:[#allocation4 + $0x60] sm:$0xff]
    %v269 = vld [vmem:[#allocation4 + $0x68] sm:$0xff]
    %v270 = vld [vmem:[#allocation4 + $0x70] sm:$0xff]
    %v271 = vld [vmem:[#allocation4 + $0x78] sm:$0xff]
    %v272 = vld [vmem:[#allocation4 + $0x80] sm:$0xff]
    %v273 = vld [vmem:[#allocation4 + $0x88] sm:$0xff]
    %v274 = vld [vmem:[#allocation4 + $0x90] sm:$0xff]
    %v275 = vld [vmem:[#allocation4 + $0x98] sm:$0xff]
    %v276 = vld [vmem:[#allocation4 + $0xa0] sm:$0xff]
    %v277 = vld [vmem:[#allocation4 + $0xa8] sm:$0xff]
    %v278 = vld [vmem:[#allocation4 + $0xb0] sm:$0xff]
    %v279 = vld [vmem:[#allocation4 + $0xb8] sm:$0xff]
    %v280 = vld [vmem:[#allocation4 + $0xc0] sm:$0xff]
    %v281 = vld [vmem:[#allocation4 + $0xc8] sm:$0xff]
    %v282 = vld [vmem:[#allocation4 + $0xd0] sm:$0xff]
    %v283 = vld [vmem:[#allocation4 + $0xd8] sm:$0xff]
    %v284 = vld [vmem:[#allocation4 + $0xe0] sm:$0xff]
    %v285 = vld [vmem:[#allocation4 + $0xe8] sm:$0xff]
    %v286 = vld [vmem:[#allocation4 + $0xf0] sm:$0xff]
    %v287 = vld [vmem:[#allocation4 + $0xf8] sm:$0xff]
    %v288 = vld [vmem:[#allocation4 + $0x100] sm:$0xff]
    %v289 = vld [vmem:[#allocation4 + $0x108] sm:$0xff]
    %v290 = vld [vmem:[#allocation4 + $0x110] sm:$0xff]
    %v291 = vld [vmem:[#allocation4 + $0x118] sm:$0xff]
    %v292 = vld [vmem:[#allocation4 + $0x120] sm:$0xff]
    %v293 = vld [vmem:[#allocation4 + $0x128] sm:$0xff]
    %v294 = vld [vmem:[#allocation4 + $0x130] sm:$0xff]
    %v295 = vld [vmem:[#allocation4 + $0x138] sm:$0xff]
    %v296 = vld [vmem:[#allocation4 + $0x140] sm:$0xff]
    %v297 = vld [vmem:[#allocation4 + $0x148] sm:$0xff]
    %v298 = vld [vmem:[#allocation4 + $0x150] sm:$0xff]
    %v299 = vld [vmem:[#allocation4 + $0x158] sm:$0xff]
    %v300 = vld [vmem:[#allocation4 + $0x160] sm:$0xff]
    %v301 = vld [vmem:[#allocation4 + $0x168] sm:$0xff]
    %v302 = vld [vmem:[#allocation4 + $0x170] sm:$0xff]
    %v303 = vld [vmem:[#allocation4 + $0x178] sm:$0xff]
    %v304 = vld [vmem:[#allocation4 + $0x180] sm:$0xff]
    %v305 = vld [vmem:[#allocation4 + $0x188] sm:$0xff]
    %v306 = vld [vmem:[#allocation4 + $0x190] sm:$0xff]
    %v307 = vld [vmem:[#allocation4 + $0x198] sm:$0xff]
    %v308 = vld [vmem:[#allocation4 + $0x1a0] sm:$0xff]
    %v309 = vld [vmem:[#allocation4 + $0x1a8] sm:$0xff]
    %v310 = vld [vmem:[#allocation4 + $0x1b0] sm:$0xff]
    %v311 = vld [vmem:[#allocation4 + $0x1b8] sm:$0xff]
    %v312 = vld [vmem:[#allocation4 + $0x1c0] sm:$0xff]
    %v313 = vld [vmem:[#allocation4 + $0x1c8] sm:$0xff]
    %v314 = vld [vmem:[#allocation4 + $0x1d0] sm:$0xff]
    %v315 = vld [vmem:[#allocation4 + $0x1d8] sm:$0xff]
    %v316 = vld [vmem:[#allocation4 + $0x1e0] sm:$0xff]
    %v317 = vld [vmem:[#allocation4 + $0x1e8] sm:$0xff]
    %v318 = vld [vmem:[#allocation4 + $0x1f0] sm:$0xff]
    %v319 = vld [vmem:[#allocation4 + $0x1f8] sm:$0xff]
    %v320 = vld [vmem:[%s7] sm:$0xf]
    %v322 = vperm.slane %v320, 0
    %v323 = vperm.slane %v320, 1
    %v324 = vperm.slane %v320, 2
    %v325 = vperm.slane %v320, 3
    %v394 = vunpack.c.l.b16 %v256
    %v395 = vunpack.c.h.b16 %v256
    %v396 = vunpack.c.l.b16 %v257
    %v397 = vunpack.c.h.b16 %v257
    %v398 = vunpack.c.l.b16 %v258
    %v399 = vunpack.c.h.b16 %v258
    %v400 = vunpack.c.l.b16 %v259
    %v401 = vunpack.c.h.b16 %v259
    %v402 = vunpack.c.l.b16 %v260
    %v403 = vunpack.c.h.b16 %v260
    %v404 = vunpack.c.l.b16 %v261
    %v405 = vunpack.c.h.b16 %v261
    %v406 = vunpack.c.l.b16 %v262
    %v407 = vunpack.c.h.b16 %v262
    %v408 = vunpack.c.l.b16 %v263
    %v409 = vunpack.c.h.b16 %v263
    %v410 = vunpack.c.l.b16 %v264
    %v411 = vunpack.c.h.b16 %v264
    %v412 = vunpack.c.l.b16 %v265
    %v413 = vunpack.c.h.b16 %v265
    %v414 = vunpack.c.l.b16 %v266
    %v415 = vunpack.c.h.b16 %v266
    %v416 = vunpack.c.l.b16 %v267
    %v417 = vunpack.c.h.b16 %v267
    %v418 = vunpack.c.l.b16 %v268
    %v419 = vunpack.c.h.b16 %v268
    %v420 = vunpack.c.l.b16 %v269
    %v421 = vunpack.c.h.b16 %v269
    %v422 = vunpack.c.l.b16 %v270
    %v423 = vunpack.c.h.b16 %v270
    %v424 = vunpack.c.l.b16 %v271
    %v425 = vunpack.c.h.b16 %v271
    %v426 = vunpack.c.l.b16 %v272
    %v427 = vunpack.c.h.b16 %v272
    %v428 = vunpack.c.l.b16 %v273
    %v429 = vunpack.c.h.b16 %v273
    %v430 = vunpack.c.l.b16 %v274
    %v431 = vunpack.c.h.b16 %v274
    %v432 = vunpack.c.l.b16 %v275
    %v433 = vunpack.c.h.b16 %v275
    %v434 = vunpack.c.l.b16 %v276
    %v435 = vunpack.c.h.b16 %v276
    %v436 = vunpack.c.l.b16 %v277
    %v437 = vunpack.c.h.b16 %v277
    %v438 = vunpack.c.l.b16 %v278
    %v439 = vunpack.c.h.b16 %v278
    %v440 = vunpack.c.l.b16 %v279
    %v441 = vunpack.c.h.b16 %v279
    %v442 = vunpack.c.l.b16 %v280
    %v443 = vunpack.c.h.b16 %v280
    %v444 = vunpack.c.l.b16 %v281
    %v445 = vunpack.c.h.b16 %v281
    %v446 = vunpack.c.l.b16 %v282
    %v447 = vunpack.c.h.b16 %v282
    %v448 = vunpack.c.l.b16 %v283
    %v449 = vunpack.c.h.b16 %v283
    %v450 = vunpack.c.l.b16 %v284
    %v451 = vunpack.c.h.b16 %v284
    %v452 = vunpack.c.l.b16 %v285
    %v453 = vunpack.c.h.b16 %v285
    %v454 = vunpack.c.l.b16 %v286
    %v455 = vunpack.c.h.b16 %v286
    %v456 = vunpack.c.l.b16 %v287
    %v457 = vunpack.c.h.b16 %v287
    %v458 = vunpack.c.l.b16 %v288
    %v459 = vunpack.c.h.b16 %v288
    %v460 = vunpack.c.l.b16 %v289
    %v461 = vunpack.c.h.b16 %v289
    %v462 = vunpack.c.l.b16 %v290
    %v463 = vunpack.c.h.b16 %v290
    %v464 = vunpack.c.l.b16 %v291
    %v465 = vunpack.c.h.b16 %v291
    %v466 = vunpack.c.l.b16 %v292
    %v467 = vunpack.c.h.b16 %v292
    %v468 = vunpack.c.l.b16 %v293
    %v469 = vunpack.c.h.b16 %v293
    %v470 = vunpack.c.l.b16 %v294
    %v471 = vunpack.c.h.b16 %v294
    %v472 = vunpack.c.l.b16 %v295
    %v473 = vunpack.c.h.b16 %v295
    %v474 = vunpack.c.l.b16 %v296
    %v475 = vunpack.c.h.b16 %v296
    %v476 = vunpack.c.l.b16 %v297
    %v477 = vunpack.c.h.b16 %v297
    %v478 = vunpack.c.l.b16 %v298
    %v479 = vunpack.c.h.b16 %v298
    %v480 = vunpack.c.l.b16 %v299
    %v481 = vunpack.c.h.b16 %v299
    %v482 = vunpack.c.l.b16 %v300
    %v483 = vunpack.c.h.b16 %v300
    %v484 = vunpack.c.l.b16 %v301
    %v485 = vunpack.c.h.b16 %v301
    %v486 = vunpack.c.l.b16 %v302
    %v487 = vunpack.c.h.b16 %v302
    %v488 = vunpack.c.l.b16 %v303
    %v489 = vunpack.c.h.b16 %v303
    %v490 = vunpack.c.l.b16 %v304
    %v491 = vunpack.c.h.b16 %v304
    %v492 = vunpack.c.l.b16 %v305
    %v493 = vunpack.c.h.b16 %v305
    %v494 = vunpack.c.l.b16 %v306
    %v495 = vunpack.c.h.b16 %v306
    %v496 = vunpack.c.l.b16 %v307
    %v497 = vunpack.c.h.b16 %v307
    %v498 = vunpack.c.l.b16 %v308
    %v499 = vunpack.c.h.b16 %v308
    %v500 = vunpack.c.l.b16 %v309
    %v501 = vunpack.c.h.b16 %v309
    %v502 = vunpack.c.l.b16 %v310
    %v503 = vunpack.c.h.b16 %v310
    %v504 = vunpack.c.l.b16 %v311
    %v505 = vunpack.c.h.b16 %v311
    %v506 = vunpack.c.l.b16 %v312
    %v507 = vunpack.c.h.b16 %v312
    %v508 = vunpack.c.l.b16 %v313
    %v509 = vunpack.c.h.b16 %v313
    %v510 = vunpack.c.l.b16 %v314
    %v511 = vunpack.c.h.b16 %v314
    %v512 = vunpack.c.l.b16 %v315
    %v513 = vunpack.c.h.b16 %v315
    %v514 = vunpack.c.l.b16 %v316
    %v515 = vunpack.c.h.b16 %v316
    %v516 = vunpack.c.l.b16 %v317
    %v517 = vunpack.c.h.b16 %v317
    %v518 = vunpack.c.l.b16 %v318
    %v519 = vunpack.c.h.b16 %v318
    %v520 = vunpack.c.l.b16 %v319
    %v521 = vunpack.c.h.b16 %v319
    %v522 = vpack.c.b16 %v398, %v394
    %v523 = vpack.c.b16 %v399, %v395
    %v524 = vpack.c.b16 %v400, %v396
    %v525 = vpack.c.b16 %v401, %v397
    %v526 = vpack.c.b16 %v406, %v402
    %v527 = vpack.c.b16 %v407, %v403
    %v528 = vpack.c.b16 %v408, %v404
    %v529 = vpack.c.b16 %v409, %v405
    %v530 = vpack.c.b16 %v414, %v410
    %v531 = vpack.c.b16 %v415, %v411
    %v532 = vpack.c.b16 %v416, %v412
    %v533 = vpack.c.b16 %v417, %v413
    %v534 = vpack.c.b16 %v422, %v418
    %v535 = vpack.c.b16 %v423, %v419
    %v536 = vpack.c.b16 %v424, %v420
    %v537 = vpack.c.b16 %v425, %v421
    %v538 = vpack.c.b16 %v430, %v426
    %v539 = vpack.c.b16 %v431, %v427
    %v540 = vpack.c.b16 %v432, %v428
    %v541 = vpack.c.b16 %v433, %v429
    %v542 = vpack.c.b16 %v438, %v434
    %v543 = vpack.c.b16 %v439, %v435
    %v544 = vpack.c.b16 %v440, %v436
    %v545 = vpack.c.b16 %v441, %v437
    %v546 = vpack.c.b16 %v446, %v442
    %v547 = vpack.c.b16 %v447, %v443
    %v548 = vpack.c.b16 %v448, %v444
    %v549 = vpack.c.b16 %v449, %v445
    %v550 = vpack.c.b16 %v454, %v450
    %v551 = vpack.c.b16 %v455, %v451
    %v552 = vpack.c.b16 %v456, %v452
    %v553 = vpack.c.b16 %v457, %v453
    %v554 = vpack.c.b16 %v462, %v458
    %v555 = vpack.c.b16 %v463, %v459
    %v556 = vpack.c.b16 %v464, %v460
    %v557 = vpack.c.b16 %v465, %v461
    %v558 = vpack.c.b16 %v470, %v466
    %v559 = vpack.c.b16 %v471, %v467
    %v560 = vpack.c.b16 %v472, %v468
    %v561 = vpack.c.b16 %v473, %v469
    %v562 = vpack.c.b16 %v478, %v474
    %v563 = vpack.c.b16 %v479, %v475
    %v564 = vpack.c.b16 %v480, %v476
    %v565 = vpack.c.b16 %v481, %v477
    %v566 = vpack.c.b16 %v486, %v482
    %v567 = vpack.c.b16 %v487, %v483
    %v568 = vpack.c.b16 %v488, %v484
    %v569 = vpack.c.b16 %v489, %v485
    %v570 = vpack.c.b16 %v494, %v490
    %v571 = vpack.c.b16 %v495, %v491
    %v572 = vpack.c.b16 %v496, %v492
    %v573 = vpack.c.b16 %v497, %v493
    %v574 = vpack.c.b16 %v502, %v498
    %v575 = vpack.c.b16 %v503, %v499
    %v576 = vpack.c.b16 %v504, %v500
    %v577 = vpack.c.b16 %v505, %v501
    %v578 = vpack.c.b16 %v510, %v506
    %v579 = vpack.c.b16 %v511, %v507
    %v580 = vpack.c.b16 %v512, %v508
    %v581 = vpack.c.b16 %v513, %v509
    %v582 = vpack.c.b16 %v518, %v514
    %v583 = vpack.c.b16 %v519, %v515
    %v584 = vpack.c.b16 %v520, %v516
    %v585 = vpack.c.b16 %v521, %v517
    %650 = vmatpush.bf16.msra.mxu0 %v550
    %651 = vmatpush.bf16.msra.mxu0 %v546
    %652 = vmatpush.bf16.msra.mxu0 %v542
    %653 = vmatpush.bf16.msra.mxu0 %v538
    %654 = vmatpush.bf16.msra.mxu0 %v534
    %655 = vmatpush.bf16.msra.mxu0 %v530
    %656 = vmatpush.bf16.msra.mxu0 %v526
    %657 = vmatpush.bf16.msra.mxu0 %v522
    %658 = vmatmul.bf16.gmra.mxu0 %v254
    %v659 = vpop.f32.mrf.mxu0
    %v660 = vadd.f32 %v322, %v659
    %v661 = vpop.f32.mrf.mxu0
    %662 = vdwg.mxu0
    %663 = vmatpush.bf16.msra.mxu0 %v582
    %664 = vmatpush.bf16.msra.mxu0 %v578
    %665 = vmatpush.bf16.msra.mxu0 %v574
    %666 = vmatpush.bf16.msra.mxu0 %v570
    %667 = vmatpush.bf16.msra.mxu0 %v566
    %668 = vmatpush.bf16.msra.mxu0 %v562
    %669 = vmatpush.bf16.msra.mxu0 %v558
    %670 = vmatpush.bf16.msra.mxu0 %v554
    %671 = vmatmul.bf16.gmra.mxu0 %v255
    %v672 = vpop.f32.mrf.mxu0
    %v673 = vadd.f32 %v660, %v672
    %v674 = vpop.f32.mrf.mxu0
    %675 = vdwg.mxu0
    %676 = vmatpush.bf16.msra.mxu0 %v551
    %677 = vmatpush.bf16.msra.mxu0 %v547
    %678 = vmatpush.bf16.msra.mxu0 %v543
    %679 = vmatpush.bf16.msra.mxu0 %v539
    %680 = vmatpush.bf16.msra.mxu0 %v535
    %681 = vmatpush.bf16.msra.mxu0 %v531
    %682 = vmatpush.bf16.msra.mxu0 %v527
    %683 = vmatpush.bf16.msra.mxu0 %v523
    %684 = vmatmul.bf16.gmra.mxu0 %v254
    %v685 = vpop.f32.mrf.mxu0
    %v686 = vadd.f32 %v323, %v685
    %v687 = vpop.f32.mrf.mxu0
    %688 = vdwg.mxu0
    %689 = vmatpush.bf16.msra.mxu0 %v583
    %690 = vmatpush.bf16.msra.mxu0 %v579
    %691 = vmatpush.bf16.msra.mxu0 %v575
    %692 = vmatpush.bf16.msra.mxu0 %v571
    %693 = vmatpush.bf16.msra.mxu0 %v567
    %694 = vmatpush.bf16.msra.mxu0 %v563
    %695 = vmatpush.bf16.msra.mxu0 %v559
    %696 = vmatpush.bf16.msra.mxu0 %v555
    %697 = vmatmul.bf16.gmra.mxu0 %v255
    %v698 = vpop.f32.mrf.mxu0
    %v699 = vadd.f32 %v686, %v698
    %v700 = vpop.f32.mrf.mxu0
    %701 = vdwg.mxu0
    %702 = vmatpush.bf16.msra.mxu0 %v552
    %703 = vmatpush.bf16.msra.mxu0 %v548
    %704 = vmatpush.bf16.msra.mxu0 %v544
    %705 = vmatpush.bf16.msra.mxu0 %v540
    %706 = vmatpush.bf16.msra.mxu0 %v536
    %707 = vmatpush.bf16.msra.mxu0 %v532
    %708 = vmatpush.bf16.msra.mxu0 %v528
    %709 = vmatpush.bf16.msra.mxu0 %v524
    %710 = vmatmul.bf16.gmra.mxu0 %v254
    %v711 = vpop.f32.mrf.mxu0
    %v712 = vadd.f32 %v324, %v711
    %v713 = vpop.f32.mrf.mxu0
    %714 = vdwg.mxu0
    %715 = vmatpush.bf16.msra.mxu0 %v584
    %716 = vmatpush.bf16.msra.mxu0 %v580
    %717 = vmatpush.bf16.msra.mxu0 %v576
    %718 = vmatpush.bf16.msra.mxu0 %v572
    %719 = vmatpush.bf16.msra.mxu0 %v568
    %720 = vmatpush.bf16.msra.mxu0 %v564
    %721 = vmatpush.bf16.msra.mxu0 %v560
    %722 = vmatpush.bf16.msra.mxu0 %v556
    %723 = vmatmul.bf16.gmra.mxu0 %v255
    %v724 = vpop.f32.mrf.mxu0
    %v725 = vadd.f32 %v712, %v724
    %v726 = vpop.f32.mrf.mxu0
    %727 = vdwg.mxu0
    %728 = vmatpush.bf16.msra.mxu0 %v553
    %729 = vmatpush.bf16.msra.mxu0 %v549
    %730 = vmatpush.bf16.msra.mxu0 %v545
    %731 = vmatpush.bf16.msra.mxu0 %v541
    %732 = vmatpush.bf16.msra.mxu0 %v537
    %733 = vmatpush.bf16.msra.mxu0 %v533
    %734 = vmatpush.bf16.msra.mxu0 %v529
    %735 = vmatpush.bf16.msra.mxu0 %v525
    %736 = vmatmul.bf16.gmra.mxu0 %v254
    %v737 = vpop.f32.mrf.mxu0
    %v738 = vadd.f32 %v325, %v737
    %v739 = vpop.f32.mrf.mxu0
    %740 = vdwg.mxu0
    %741 = vmatpush.bf16.msra.mxu0 %v585
    %742 = vmatpush.bf16.msra.mxu0 %v581
    %743 = vmatpush.bf16.msra.mxu0 %v577
    %744 = vmatpush.bf16.msra.mxu0 %v573
    %745 = vmatpush.bf16.msra.mxu0 %v569
    %746 = vmatpush.bf16.msra.mxu0 %v565
    %747 = vmatpush.bf16.msra.mxu0 %v561
    %748 = vmatpush.bf16.msra.mxu0 %v557
    %749 = vmatmul.bf16.gmra.mxu0 %v255
    %v750 = vpop.f32.mrf.mxu0
    %v751 = vadd.f32 %v738, %v750
    %v752 = vpop.f32.mrf.mxu0
    %753 = vdwg.mxu0
    %v754 = vmul.f32 %v673, 0.2
    %v755 = vmul.f32 %v699, 0.2
    %v756 = vmul.f32 %v725, 0.2
    %v757 = vmul.f32 %v751, 0.2
    %v758 = vmax.f32 %v673, %v754
    %v759 = vmax.f32 %v699, %v755
    %v760 = vmax.f32 %v725, %v756
    %v761 = vmax.f32 %v751, %v757
    %v762 = vpack.c.bf16 %v758, %v758
    %v763 = vpack.c.bf16 %v759, %v759
    %v764 = vpack.c.bf16 %v760, %v760
    %v765 = vpack.c.bf16 %v761, %v761
    %v766 = vld [vmem:[#allocation6] sm:$0xff]
    %v767 = vld [vmem:[#allocation6 + $0x8] sm:$0xff]
    %v768 = vld [vmem:[#allocation6 + $0x10] sm:$0xff]
    %v769 = vld [vmem:[#allocation6 + $0x18] sm:$0xff]
    %v770 = vld [vmem:[#allocation6 + $0x20] sm:$0xff]
    %v771 = vld [vmem:[#allocation6 + $0x28] sm:$0xff]
    %v772 = vld [vmem:[#allocation6 + $0x30] sm:$0xff]
    %v773 = vld [vmem:[#allocation6 + $0x38] sm:$0xff]
    %v774 = vld [vmem:[#allocation6 + $0x40] sm:$0xff]
    %v775 = vld [vmem:[#allocation6 + $0x48] sm:$0xff]
    %v776 = vld [vmem:[#allocation6 + $0x50] sm:$0xff]
    %v777 = vld [vmem:[#allocation6 + $0x58] sm:$0xff]
    %v778 = vld [vmem:[#allocation6 + $0x60] sm:$0xff]
    %v779 = vld [vmem:[#allocation6 + $0x68] sm:$0xff]
    %v780 = vld [vmem:[#allocation6 + $0x70] sm:$0xff]
    %v781 = vld [vmem:[#allocation6 + $0x78] sm:$0xff]
    %v782 = vld [vmem:[#allocation6 + $0x80] sm:$0xff]
    %v783 = vld [vmem:[#allocation6 + $0x88] sm:$0xff]
    %v784 = vld [vmem:[#allocation6 + $0x90] sm:$0xff]
    %v785 = vld [vmem:[#allocation6 + $0x98] sm:$0xff]
    %v786 = vld [vmem:[#allocation6 + $0xa0] sm:$0xff]
    %v787 = vld [vmem:[#allocation6 + $0xa8] sm:$0xff]
    %v788 = vld [vmem:[#allocation6 + $0xb0] sm:$0xff]
    %v789 = vld [vmem:[#allocation6 + $0xb8] sm:$0xff]
    %v790 = vld [vmem:[#allocation6 + $0xc0] sm:$0xff]
    %v791 = vld [vmem:[#allocation6 + $0xc8] sm:$0xff]
    %v792 = vld [vmem:[#allocation6 + $0xd0] sm:$0xff]
    %v793 = vld [vmem:[#allocation6 + $0xd8] sm:$0xff]
    %v794 = vld [vmem:[#allocation6 + $0xe0] sm:$0xff]
    %v795 = vld [vmem:[#allocation6 + $0xe8] sm:$0xff]
    %v796 = vld [vmem:[#allocation6 + $0xf0] sm:$0xff]
    %v797 = vld [vmem:[#allocation6 + $0xf8] sm:$0xff]
    %v798 = vld [vmem:[#allocation6 + $0x100] sm:$0xff]
    %v799 = vld [vmem:[#allocation6 + $0x108] sm:$0xff]
    %v800 = vld [vmem:[#allocation6 + $0x110] sm:$0xff]
    %v801 = vld [vmem:[#allocation6 + $0x118] sm:$0xff]
    %v802 = vld [vmem:[#allocation6 + $0x120] sm:$0xff]
    %v803 = vld [vmem:[#allocation6 + $0x128] sm:$0xff]
    %v804 = vld [vmem:[#allocation6 + $0x130] sm:$0xff]
    %v805 = vld [vmem:[#allocation6 + $0x138] sm:$0xff]
    %v806 = vld [vmem:[#allocation6 + $0x140] sm:$0xff]
    %v807 = vld [vmem:[#allocation6 + $0x148] sm:$0xff]
    %v808 = vld [vmem:[#allocation6 + $0x150] sm:$0xff]
    %v809 = vld [vmem:[#allocation6 + $0x158] sm:$0xff]
    %v810 = vld [vmem:[#allocation6 + $0x160] sm:$0xff]
    %v811 = vld [vmem:[#allocation6 + $0x168] sm:$0xff]
    %v812 = vld [vmem:[#allocation6 + $0x170] sm:$0xff]
    %v813 = vld [vmem:[#allocation6 + $0x178] sm:$0xff]
    %v814 = vld [vmem:[#allocation6 + $0x180] sm:$0xff]
    %v815 = vld [vmem:[#allocation6 + $0x188] sm:$0xff]
    %v816 = vld [vmem:[#allocation6 + $0x190] sm:$0xff]
    %v817 = vld [vmem:[#allocation6 + $0x198] sm:$0xff]
    %v818 = vld [vmem:[#allocation6 + $0x1a0] sm:$0xff]
    %v819 = vld [vmem:[#allocation6 + $0x1a8] sm:$0xff]
    %v820 = vld [vmem:[#allocation6 + $0x1b0] sm:$0xff]
    %v821 = vld [vmem:[#allocation6 + $0x1b8] sm:$0xff]
    %v822 = vld [vmem:[#allocation6 + $0x1c0] sm:$0xff]
    %v823 = vld [vmem:[#allocation6 + $0x1c8] sm:$0xff]
    %v824 = vld [vmem:[#allocation6 + $0x1d0] sm:$0xff]
    %v825 = vld [vmem:[#allocation6 + $0x1d8] sm:$0xff]
    %v826 = vld [vmem:[#allocation6 + $0x1e0] sm:$0xff]
    %v827 = vld [vmem:[#allocation6 + $0x1e8] sm:$0xff]
    %v828 = vld [vmem:[#allocation6 + $0x1f0] sm:$0xff]
    %v829 = vld [vmem:[#allocation6 + $0x1f8] sm:$0xff]
    %v830 = vld [vmem:[%s8] sm:$0x3]
    %v832 = vperm.slane %v830, 0
    %v833 = vperm.slane %v830, 1
    %v900 = vunpack.c.l.b16 %v766
    %v901 = vunpack.c.h.b16 %v766
    %v902 = vunpack.c.l.b16 %v767
    %v903 = vunpack.c.h.b16 %v767
    %v904 = vunpack.c.l.b16 %v768
    %v905 = vunpack.c.h.b16 %v768
    %v906 = vunpack.c.l.b16 %v769
    %v907 = vunpack.c.h.b16 %v769
    %v908 = vunpack.c.l.b16 %v770
    %v909 = vunpack.c.h.b16 %v770
    %v910 = vunpack.c.l.b16 %v771
    %v911 = vunpack.c.h.b16 %v771
    %v912 = vunpack.c.l.b16 %v772
    %v913 = vunpack.c.h.b16 %v772
    %v914 = vunpack.c.l.b16 %v773
    %v915 = vunpack.c.h.b16 %v773
    %v916 = vunpack.c.l.b16 %v774
    %v917 = vunpack.c.h.b16 %v774
    %v918 = vunpack.c.l.b16 %v775
    %v919 = vunpack.c.h.b16 %v775
    %v920 = vunpack.c.l.b16 %v776
    %v921 = vunpack.c.h.b16 %v776
    %v922 = vunpack.c.l.b16 %v777
    %v923 = vunpack.c.h.b16 %v777
    %v924 = vunpack.c.l.b16 %v778
    %v925 = vunpack.c.h.b16 %v778
    %v926 = vunpack.c.l.b16 %v779
    %v927 = vunpack.c.h.b16 %v779
    %v928 = vunpack.c.l.b16 %v780
    %v929 = vunpack.c.h.b16 %v780
    %v930 = vunpack.c.l.b16 %v781
    %v931 = vunpack.c.h.b16 %v781
    %v932 = vunpack.c.l.b16 %v782
    %v933 = vunpack.c.h.b16 %v782
    %v934 = vunpack.c.l.b16 %v783
    %v935 = vunpack.c.h.b16 %v783
    %v936 = vunpack.c.l.b16 %v784
    %v937 = vunpack.c.h.b16 %v784
    %v938 = vunpack.c.l.b16 %v785
    %v939 = vunpack.c.h.b16 %v785
    %v940 = vunpack.c.l.b16 %v786
    %v941 = vunpack.c.h.b16 %v786
    %v942 = vunpack.c.l.b16 %v787
    %v943 = vunpack.c.h.b16 %v787
    %v944 = vunpack.c.l.b16 %v788
    %v945 = vunpack.c.h.b16 %v788
    %v946 = vunpack.c.l.b16 %v789
    %v947 = vunpack.c.h.b16 %v789
    %v948 = vunpack.c.l.b16 %v790
    %v949 = vunpack.c.h.b16 %v790
    %v950 = vunpack.c.l.b16 %v791
    %v951 = vunpack.c.h.b16 %v791
    %v952 = vunpack.c.l.b16 %v792
    %v953 = vunpack.c.h.b16 %v792
    %v954 = vunpack.c.l.b16 %v793
    %v955 = vunpack.c.h.b16 %v793
    %v956 = vunpack.c.l.b16 %v794
    %v957 = vunpack.c.h.b16 %v794
    %v958 = vunpack.c.l.b16 %v795
    %v959 = vunpack.c.h.b16 %v795
    %v960 = vunpack.c.l.b16 %v796
    %v961 = vunpack.c.h.b16 %v796
    %v962 = vunpack.c.l.b16 %v797
    %v963 = vunpack.c.h.b16 %v797
    %v964 = vunpack.c.l.b16 %v798
    %v965 = vunpack.c.h.b16 %v798
    %v966 = vunpack.c.l.b16 %v799
    %v967 = vunpack.c.h.b16 %v799
    %v968 = vunpack.c.l.b16 %v800
    %v969 = vunpack.c.h.b16 %v800
    %v970 = vunpack.c.l.b16 %v801
    %v971 = vunpack.c.h.b16 %v801
    %v972 = vunpack.c.l.b16 %v802
    %v973 = vunpack.c.h.b16 %v802
    %v974 = vunpack.c.l.b16 %v803
    %v975 = vunpack.c.h.b16 %v803
    %v976 = vunpack.c.l.b16 %v804
    %v977 = vunpack.c.h.b16 %v804
    %v978 = vunpack.c.l.b16 %v805
    %v979 = vunpack.c.h.b16 %v805
    %v980 = vunpack.c.l.b16 %v806
    %v981 = vunpack.c.h.b16 %v806
    %v982 = vunpack.c.l.b16 %v807
    %v983 = vunpack.c.h.b16 %v807
    %v984 = vunpack.c.l.b16 %v808
    %v985 = vunpack.c.h.b16 %v808
    %v986 = vunpack.c.l.b16 %v809
    %v987 = vunpack.c.h.b16 %v809
    %v988 = vunpack.c.l.b16 %v810
    %v989 = vunpack.c.h.b16 %v810
    %v990 = vunpack.c.l.b16 %v811
    %v991 = vunpack.c.h.b16 %v811
    %v992 = vunpack.c.l.b16 %v812
    %v993 = vunpack.c.h.b16 %v812
    %v994 = vunpack.c.l.b16 %v813
    %v995 = vunpack.c.h.b16 %v813
    %v996 = vunpack.c.l.b16 %v814
    %v997 = vunpack.c.h.b16 %v814
    %v998 = vunpack.c.l.b16 %v815
    %v999 = vunpack.c.h.b16 %v815
    %v1000 = vunpack.c.l.b16 %v816
    %v1001 = vunpack.c.h.b16 %v816
    %v1002 = vunpack.c.l.b16 %v817
    %v1003 = vunpack.c.h.b16 %v817
    %v1004 = vunpack.c.l.b16 %v818
    %v1005 = vunpack.c.h.b16 %v818
    %v1006 = vunpack.c.l.b16 %v819
    %v1007 = vunpack.c.h.b16 %v819
    %v1008 = vunpack.c.l.b16 %v820
    %v1009 = vunpack.c.h.b16 %v820
    %v1010 = vunpack.c.l.b16 %v821
    %v1011 = vunpack.c.h.b16 %v821
    %v1012 = vunpack.c.l.b16 %v822
    %v1013 = vunpack.c.h.b16 %v822
    %v1014 = vunpack.c.l.b16 %v823
    %v1015 = vunpack.c.h.b16 %v823
    %v1016 = vunpack.c.l.b16 %v824
    %v1017 = vunpack.c.h.b16 %v824
    %v1018 = vunpack.c.l.b16 %v825
    %v1019 = vunpack.c.h.b16 %v825
    %v1020 = vunpack.c.l.b16 %v826
    %v1021 = vunpack.c.h.b16 %v826
    %v1022 = vunpack.c.l.b16 %v827
    %v1023 = vunpack.c.h.b16 %v827
    %v1024 = vunpack.c.l.b16 %v828
    %v1025 = vunpack.c.h.b16 %v828
    %v1026 = vunpack.c.l.b16 %v829
    %v1027 = vunpack.c.h.b16 %v829
    %v1028 = vpack.c.b16 %v902, %v900
    %v1029 = vpack.c.b16 %v903, %v901
    %v1030 = vpack.c.b16 %v906, %v904
    %v1031 = vpack.c.b16 %v907, %v905
    %v1032 = vpack.c.b16 %v910, %v908
    %v1033 = vpack.c.b16 %v911, %v909
    %v1034 = vpack.c.b16 %v914, %v912
    %v1035 = vpack.c.b16 %v915, %v913
    %v1036 = vpack.c.b16 %v918, %v916
    %v1037 = vpack.c.b16 %v919, %v917
    %v1038 = vpack.c.b16 %v922, %v920
    %v1039 = vpack.c.b16 %v923, %v921
    %v1040 = vpack.c.b16 %v926, %v924
    %v1041 = vpack.c.b16 %v927, %v925
    %v1042 = vpack.c.b16 %v930, %v928
    %v1043 = vpack.c.b16 %v931, %v929
    %v1044 = vpack.c.b16 %v934, %v932
    %v1045 = vpack.c.b16 %v935, %v933
    %v1046 = vpack.c.b16 %v938, %v936
    %v1047 = vpack.c.b16 %v939, %v937
    %v1048 = vpack.c.b16 %v942, %v940
    %v1049 = vpack.c.b16 %v943, %v941
    %v1050 = vpack.c.b16 %v946, %v944
    %v1051 = vpack.c.b16 %v947, %v945
    %v1052 = vpack.c.b16 %v950, %v948
    %v1053 = vpack.c.b16 %v951, %v949
    %v1054 = vpack.c.b16 %v954, %v952
    %v1055 = vpack.c.b16 %v955, %v953
    %v1056 = vpack.c.b16 %v958, %v956
    %v1057 = vpack.c.b16 %v959, %v957
    %v1058 = vpack.c.b16 %v962, %v960
    %v1059 = vpack.c.b16 %v963, %v961
    %v1060 = vpack.c.b16 %v966, %v964
    %v1061 = vpack.c.b16 %v967, %v965
    %v1062 = vpack.c.b16 %v970, %v968
    %v1063 = vpack.c.b16 %v971, %v969
    %v1064 = vpack.c.b16 %v974, %v972
    %v1065 = vpack.c.b16 %v975, %v973
    %v1066 = vpack.c.b16 %v978, %v976
    %v1067 = vpack.c.b16 %v979, %v977
    %v1068 = vpack.c.b16 %v982, %v980
    %v1069 = vpack.c.b16 %v983, %v981
    %v1070 = vpack.c.b16 %v986, %v984
    %v1071 = vpack.c.b16 %v987, %v985
    %v1072 = vpack.c.b16 %v990, %v988
    %v1073 = vpack.c.b16 %v991, %v989
    %v1074 = vpack.c.b16 %v994, %v992
    %v1075 = vpack.c.b16 %v995, %v993
    %v1076 = vpack.c.b16 %v998, %v996
    %v1077 = vpack.c.b16 %v999, %v997
    %v1078 = vpack.c.b16 %v1002, %v1000
    %v1079 = vpack.c.b16 %v1003, %v1001
    %v1080 = vpack.c.b16 %v1006, %v1004
    %v1081 = vpack.c.b16 %v1007, %v1005
    %v1082 = vpack.c.b16 %v1010, %v1008
    %v1083 = vpack.c.b16 %v1011, %v1009
    %v1084 = vpack.c.b16 %v1014, %v1012
    %v1085 = vpack.c.b16 %v1015, %v1013
    %v1086 = vpack.c.b16 %v1018, %v1016
    %v1087 = vpack.c.b16 %v1019, %v1017
    %v1088 = vpack.c.b16 %v1022, %v1020
    %v1089 = vpack.c.b16 %v1023, %v1021
    %v1090 = vpack.c.b16 %v1026, %v1024
    %v1091 = vpack.c.b16 %v1027, %v1025
    %1156 = vmatpush.bf16.msra.mxu0 %v1042
    %1157 = vmatpush.bf16.msra.mxu0 %v1040
    %1158 = vmatpush.bf16.msra.mxu0 %v1038
    %1159 = vmatpush.bf16.msra.mxu0 %v1036
    %1160 = vmatpush.bf16.msra.mxu0 %v1034
    %1161 = vmatpush.bf16.msra.mxu0 %v1032
    %1162 = vmatpush.bf16.msra.mxu0 %v1030
    %1163 = vmatpush.bf16.msra.mxu0 %v1028
    %1164 = vmatmul.bf16.gmra.mxu0 %v762
    %v1165 = vpop.f32.mrf.mxu0
    %v1166 = vadd.f32 %v832, %v1165
    %v1167 = vpop.f32.mrf.mxu0
    %1168 = vdwg.mxu0
    %1169 = vmatpush.bf16.msra.mxu0 %v1058
    %1170 = vmatpush.bf16.msra.mxu0 %v1056
    %1171 = vmatpush.bf16.msra.mxu0 %v1054
    %1172 = vmatpush.bf16.msra.mxu0 %v1052
    %1173 = vmatpush.bf16.msra.mxu0 %v1050
    %1174 = vmatpush.bf16.msra.mxu0 %v1048
    %1175 = vmatpush.bf16.msra.mxu0 %v1046
    %1176 = vmatpush.bf16.msra.mxu0 %v1044
    %1177 = vmatmul.bf16.gmra.mxu0 %v763
    %v1178 = vpop.f32.mrf.mxu0
    %v1179 = vadd.f32 %v1166, %v1178
    %v1180 = vpop.f32.mrf.mxu0
    %1181 = vdwg.mxu0
    %1182 = vmatpush.bf16.msra.mxu0 %v1074
    %1183 = vmatpush.bf16.msra.mxu0 %v1072
    %1184 = vmatpush.bf16.msra.mxu0 %v1070
    %1185 = vmatpush.bf16.msra.mxu0 %v1068
    %1186 = vmatpush.bf16.msra.mxu0 %v1066
    %1187 = vmatpush.bf16.msra.mxu0 %v1064
    %1188 = vmatpush.bf16.msra.mxu0 %v1062
    %1189 = vmatpush.bf16.msra.mxu0 %v1060
    %1190 = vmatmul.bf16.gmra.mxu0 %v764
    %v1191 = vpop.f32.mrf.mxu0
    %v1192 = vadd.f32 %v1179, %v1191
    %v1193 = vpop.f32.mrf.mxu0
    %1194 = vdwg.mxu0
    %1195 = vmatpush.bf16.msra.mxu0 %v1090
    %1196 = vmatpush.bf16.msra.mxu0 %v1088
    %1197 = vmatpush.bf16.msra.mxu0 %v1086
    %1198 = vmatpush.bf16.msra.mxu0 %v1084
    %1199 = vmatpush.bf16.msra.mxu0 %v1082
    %1200 = vmatpush.bf16.msra.mxu0 %v1080
    %1201 = vmatpush.bf16.msra.mxu0 %v1078
    %1202 = vmatpush.bf16.msra.mxu0 %v1076
    %1203 = vmatmul.bf16.gmra.mxu0 %v765
    %v1204 = vpop.f32.mrf.mxu0
    %v1205 = vadd.f32 %v1192, %v1204
    %v1206 = vpop.f32.mrf.mxu0
    %1207 = vdwg.mxu0
    %1208 = vmatpush.bf16.msra.mxu0 %v1043
    %1209 = vmatpush.bf16.msra.mxu0 %v1041
    %1210 = vmatpush.bf16.msra.mxu0 %v1039
    %1211 = vmatpush.bf16.msra.mxu0 %v1037
    %1212 = vmatpush.bf16.msra.mxu0 %v1035
    %1213 = vmatpush.bf16.msra.mxu0 %v1033
    %1214 = vmatpush.bf16.msra.mxu0 %v1031
    %1215 = vmatpush.bf16.msra.mxu0 %v1029
    %1216 = vmatmul.bf16.gmra.mxu0 %v762
    %v1217 = vpop.f32.mrf.mxu0
    %v1218 = vadd.f32 %v833, %v1217
    %v1219 = vpop.f32.mrf.mxu0
    %1220 = vdwg.mxu0
    %1221 = vmatpush.bf16.msra.mxu0 %v1059
    %1222 = vmatpush.bf16.msra.mxu0 %v1057
    %1223 = vmatpush.bf16.msra.mxu0 %v1055
    %1224 = vmatpush.bf16.msra.mxu0 %v1053
    %1225 = vmatpush.bf16.msra.mxu0 %v1051
    %1226 = vmatpush.bf16.msra.mxu0 %v1049
    %1227 = vmatpush.bf16.msra.mxu0 %v1047
    %1228 = vmatpush.bf16.msra.mxu0 %v1045
    %1229 = vmatmul.bf16.gmra.mxu0 %v763
    %v1230 = vpop.f32.mrf.mxu0
    %v1231 = vadd.f32 %v1218, %v1230
    %v1232 = vpop.f32.mrf.mxu0
    %1233 = vdwg.mxu0
    %1234 = vmatpush.bf16.msra.mxu0 %v1075
    %1235 = vmatpush.bf16.msra.mxu0 %v1073
    %1236 = vmatpush.bf16.msra.mxu0 %v1071
    %1237 = vmatpush.bf16.msra.mxu0 %v1069
    %1238 = vmatpush.bf16.msra.mxu0 %v1067
    %1239 = vmatpush.bf16.msra.mxu0 %v1065
    %1240 = vmatpush.bf16.msra.mxu0 %v1063
    %1241 = vmatpush.bf16.msra.mxu0 %v1061
    %1242 = vmatmul.bf16.gmra.mxu0 %v764
    %v1243 = vpop.f32.mrf.mxu0
    %v1244 = vadd.f32 %v1231, %v1243
    %v1245 = vpop.f32.mrf.mxu0
    %1246 = vdwg.mxu0
    %1247 = vmatpush.bf16.msra.mxu0 %v1091
    %1248 = vmatpush.bf16.msra.mxu0 %v1089
    %1249 = vmatpush.bf16.msra.mxu0 %v1087
    %1250 = vmatpush.bf16.msra.mxu0 %v1085
    %1251 = vmatpush.bf16.msra.mxu0 %v1083
    %1252 = vmatpush.bf16.msra.mxu0 %v1081
    %1253 = vmatpush.bf16.msra.mxu0 %v1079
    %1254 = vmatpush.bf16.msra.mxu0 %v1077
    %1255 = vmatmul.bf16.gmra.mxu0 %v765
    %v1256 = vpop.f32.mrf.mxu0
    %v1257 = vadd.f32 %v1244, %v1256
    %v1258 = vpop.f32.mrf.mxu0
    %1259 = vdwg.mxu0
    %v1260 = vtanh.pop %v1205
    %v1261 = vtanh.pop %v1257
    %v1264 = vrot.slane %v1261, 6
    %vm1265 = vcmask 1041408
    %v1266 = vsel %vm1265, %v1260, %v1264
    %1268 = vst [vmem:[%s9] sm:$0xf] %v1266
    // Predicated region
    $region50: #{generator_forward.1} parent=1 // pred_check
      _
    $region51: #{generator_forward.1} parent=1 // pred_check_branch
      %1270 = sbr.rel (0) target = $region53
    $region52: #{generator_forward.1} parent=1 // pred_region
      _
    $region53: #{generator_forward.1} parent=1 // pred_fallthru
      _
    // Predicated region
    $region54: #{generator_forward.1} parent=1 // pred_check
      _
    $region55: #{generator_forward.1} parent=1 // pred_check_branch
      %1272 = sbr.rel (0) target = $region57
    $region56: #{generator_forward.1} parent=1 // pred_region
      _
    $region57: #{generator_forward.1} parent=1 // pred_fallthru
      _
    %1273 = vsyncpa [#allocation3], 1
    %1274 = vsyncpa [#allocation5], 1

</llo_original>
